<compile_context>
chip_gen: v7x
topology: tpu7x:2x2x1
jax: 0.10.0
libtpu: 0.0.40
codegen_flags: <defaults>
</compile_context>

<pallas_src>
import jax
import jax.numpy as jnp
from jax.experimental import pallas as pl
from jax.experimental.pallas import tpu as pltpu


def _round_up(x, m):
    return (x + m - 1) // m * m


def _ulayer_matmul_kernel(x_ref, u_ref, o_ref):
    # One MXU matmul per (TM x K) activation tile against the resident U tile.
    o_ref[...] = jnp.dot(
        x_ref[...], u_ref[...], preferred_element_type=jnp.float32
    ).astype(o_ref.dtype)


_LANE = 128          # TPU lane width (last-dim tile)
_SUBLANE = 8         # f32 sublane tile (second-to-last dim)
_DEFAULT_TM = 512    # rows of x per grid step; measured ~85% HBM roofline regime
_MIN_PALLAS_ROWS = 512  # below this, launch/DMA overhead dominates -> XLA path


def ulayer_forward(x, U, *, tm=_DEFAULT_TM, force_pallas=False):
    """Equivalent of ULayer.forward: torch.matmul(x, U).

    x: (..., output_size), U: (output_size, input_size) -> (..., input_size)
    """
    out_size, in_size = U.shape
    assert x.shape[-1] == out_size, "last dim of x must equal U.shape[0]"

    lead_shape = x.shape[:-1]
    m = 1
    for d in lead_shape:
        m *= d

    # Tiny problems: the ~0.35us/step Pallas overhead dwarfs the matmul; let
    # XLA fuse it into neighboring ops instead.
    if m < _MIN_PALLAS_ROWS and not force_pallas:
        return jnp.matmul(x, U)

    x2d = x.reshape(m, out_size)

    # Lane-dense output: pad N up to a multiple of 128 so output stores are
    # full-vreg vst (not masked vst.msk). Zero columns in U are exact.
    n_pad = _round_up(in_size, _LANE)
    U_p = jnp.pad(U, ((0, 0), (0, n_pad - in_size))) if n_pad != in_size else U

    # Tile M; pad rows so the grid divides evenly (padded rows discarded later).
    tm = max(_SUBLANE, _round_up(min(tm, m), _SUBLANE))
    m_pad = _round_up(m, tm)
    if m_pad != m:
        x2d = jnp.pad(x2d, ((0, m_pad - m), (0, 0)))

    grid = (m_pad // tm,)

    # VMEM budget: double-buffered x/out tiles + resident U (f32), with margin.
    # Capped at 32 MiB so the same tile size is safe on v7x's 64 MiB VMEM.
    tile_bytes = 2 * (tm * out_size + tm * n_pad) * 4 + out_size * n_pad * 4
    vmem_limit = min(max(4 * tile_bytes, 4 * 1024 * 1024), 32 * 1024 * 1024)

    y2d = pl.pallas_call(
        _ulayer_matmul_kernel,
        out_shape=jax.ShapeDtypeStruct((m_pad, n_pad), x.dtype),
        grid=grid,
        in_specs=[
            pl.BlockSpec((tm, out_size), lambda i: (i, 0)),     # x tile, streamed
            pl.BlockSpec((out_size, n_pad), lambda i: (0, 0)),  # U resident
        ],
        out_specs=pl.BlockSpec((tm, n_pad), lambda i: (i, 0)),
        compiler_params=pltpu.CompilerParams(
            dimension_semantics=("parallel",),  # shard M tiles across TCs (v7x)
            vmem_limit_bytes=vmem_limit,
        ),
    )(x2d, U_p)

    y2d = y2d[:m, :in_size]
    return y2d.reshape(*lead_shape, in_size)


if __name__ == "__main__":
    # ULayer(input_size=64, output_size=32): U has shape (32, 64).
    input_size = 64
    output_size = 32

    key = jax.random.PRNGKey(0)
    kx, ku, kx2 = jax.random.split(key, 3)

    # Deterministic stand-in for torch.randn(output_size, input_size).
    U = jax.random.normal(ku, (output_size, input_size), dtype=jnp.float32)

    # Pallas path: batch=4, seq=256 -> M=1024 rows = 2 tiles of 512.
    x_big = jax.random.normal(kx, (4, 256, output_size), dtype=jnp.float32)
    y_big = ulayer_forward(x_big, U)
    jax.block_until_ready(y_big)
    assert y_big.shape == (4, 256, input_size)
    assert jnp.allclose(y_big, jnp.matmul(x_big, U), atol=1e-5, rtol=1e-5)

    # Tiny shape from the original demo: dispatched to the fused XLA path.
    x_small = jax.random.normal(kx2, (2, 8, output_size), dtype=jnp.float32)
    y_small = ulayer_forward(x_small, U)
    jax.block_until_ready(y_small)
    assert y_small.shape == (2, 8, input_size)
    assert jnp.allclose(y_small, jnp.matmul(x_small, U), atol=1e-5, rtol=1e-5)

    print("KERNEL_OK")
</pallas_src>

<mosaic_0001>
module attributes {stable_mosaic.version = 11 : i64} {
  func.func @_ulayer_matmul_kernel(%arg0: i32, %arg1: memref<512x32xf32, #tpu.memory_space<vmem>>, %arg2: memref<32x128xf32, #tpu.memory_space<vmem>>, %arg3: memref<512x128xf32, #tpu.memory_space<vmem>>) attributes {dimension_semantics = [#tpu.dimension_semantics<parallel>], iteration_bounds = array<i64: 2>, scalar_prefetch = 0 : i64, scratch_operands = 0 : i64, tpu.core_type = #tpu.core_type<tc>, window_params = [{transform_indices = @transform_0, window_bounds = array<i64: 512, 32>}, {pipeline_mode = #tpu.pipeline_mode<synchronous>, transform_indices = @transform_1, window_bounds = array<i64: 32, 128>}, {transform_indices = @transform_2, window_bounds = array<i64: 512, 128>}]} {
    %c0 = arith.constant 0 : index
    %c0_0 = arith.constant 0 : index
    %0 = vector.load %arg1[%c0, %c0_0] : memref<512x32xf32, #tpu.memory_space<vmem>>, vector<512x32xf32>
    %c0_1 = arith.constant 0 : index
    %c0_2 = arith.constant 0 : index
    %1 = vector.load %arg2[%c0_1, %c0_2] : memref<32x128xf32, #tpu.memory_space<vmem>>, vector<32x128xf32>
    %cst = arith.constant dense<0.000000e+00> : vector<512x128xf32>
    %2 = tpu.matmul %0, %1, %cst {dimension_numbers = #tpu.dot_dimension_numbers<[1], [0], [0], [1], [0, 0, 1, 1], [], []>} : vector<512x32xf32>, vector<32x128xf32>, vector<512x128xf32> -> vector<512x128xf32>
    %c0_3 = arith.constant 0 : index
    %c0_4 = arith.constant 0 : index
    %3 = vector.load %arg3[%c0_3, %c0_4] : memref<512x128xf32, #tpu.memory_space<vmem>>, vector<512x128xf32>
    tpu.vector_store %arg3[%c0_3, %c0_4], %2 {strides = array<i32>} : memref<512x128xf32, #tpu.memory_space<vmem>>, vector<512x128xf32>,
    return
  }
  func.func @transform_0(%arg0: i32) -> (i32, i32) {
    %c0_i32 = arith.constant 0 : i32
    %c0_i32_0 = arith.constant 0 : i32
    return %arg0, %c0_i32 : i32, i32
  }
  func.func @transform_1(%arg0: i32) -> (i32, i32) {
    %c0_i32 = arith.constant 0 : i32
    %c0_i32_0 = arith.constant 0 : i32
    %c0_i32_1 = arith.constant 0 : i32
    return %c0_i32, %c0_i32_0 : i32, i32
  }
  func.func @transform_2(%arg0: i32) -> (i32, i32) {
    %c0_i32 = arith.constant 0 : i32
    %c0_i32_0 = arith.constant 0 : i32
    return %arg0, %c0_i32 : i32, i32
  }
}

</mosaic_0001>

<llo_original>
// kernel: tpu_custom_call.1
$region0: #{tpu_custom_call.1}
  #allocation0 [shape = 'u32[]', space=smem, size = 0x4, offset = 0x4, fixed_abs, tag = 'smem constant byte address 0x4 - core index']
  #allocation1 [shape = 'u32[144,128]{1,0:T(1,128)}', space=vmem, size = 0x12000, scoped, tag = 'internal scratch']
  %s0 = inlined_call_operand.vmem [shape: f32[1024,32], index: 0, kind: input, shape index: {}]
  %s1 = inlined_call_operand.vmem [shape: f32[32,128], index: 1, kind: input, shape index: {}]
  %s2 = inlined_call_operand.hbm [shape: f32[1024,128], index: 2, kind: output, shape index: {}]
  %s3 = sld [smem:[#allocation0]]
  $region41: #{tpu_custom_call.1} parent=0
    _
  %s5 = ssub.s32 1, %s3
  %s6 = scalar_select 0, %s5, %s3
  $region1: #{tpu_custom_call.1} parent=0
    #allocation2 [shape = 'u8[524288]{0}', space=vmem, size = 0x80000, scoped, tag = 'output window, operand 0']
    #allocation3 [shape = 's32[2]{0}', space=sflag, size = 0x8, scoped, tag = 'scoped memory for tpu_custom_call.1']
    %7 = vsyncpa [#allocation3], 0
    %s8 = scalar_lea.sflag [#allocation3], 1
    %9 = vsyncpa %s8, 0
    loop: start=0, step=1, limit=4
    $region2: #{tpu_custom_call.1} parent=1 // loop_pre_header
      _
    $region3: #{tpu_custom_call.1} parent=1 // loop_header
      %s11 = sphi 0, %s15
      %p12 = scmp.ge.s32.totalorder %s11, 4
      %s21 = sphi 0, %s23
      %s24 = sphi 0, %s21
      %s25 = sphi 0, %s24
      %s41 = sphi 0, %s25
      %s45 = sphi 0, %s45
      %s47 = sphi 0, %s45
      %s48 = sphi 0, %s47
      %s62 = sphi 0, %s48
      %s68 = sphi 0, %s70
      %s71 = sphi 0, %s68
      %s72 = sphi 0, %s71
      %s88 = sphi 0, %s72
    $region4: #{tpu_custom_call.1} parent=1 // loop_header_branch
      %14 = sbr.rel (%p12) target = $region8
    $region5: #{tpu_custom_call.1} parent=1 // loop_body
      %s16 = ssub.s32 %s11, 1
      %s17 = ssub.s32 %s11, 2
      %s18 = sadd.s32 %s11, 1
      %s19 = ssub.s32 %s11, %s18
      %p20 = scmp.eq.s32.totalorder %s19, 0
      %s22 = sadd.s32 %s21, 1
      %s23 = scalar_select %p20, %s21, %s22
      %p26 = pneg %p20
      %p27 = scmp.eq.s32.totalorder %s11, 1
      %p28 = por %p26, %p27
      %p29 = scmp.ne.s32.totalorder %s21, %s24
      %p30 = scmp.eq.s32.totalorder %s11, 0
      %p31 = por %p29, %p30
      %p32 = scmp.ne.s32.totalorder %s21, %s24
      %p33 = scmp.eq.s32.totalorder %s16, 1
      %p34 = por %p32, %p33
      %p35 = scmp.ne.s32.totalorder %s24, %s25
      %p36 = scmp.eq.s32.totalorder %s16, 0
      %p37 = por %p35, %p36
      %p38 = scmp.ne.s32.totalorder %s24, %s25
      %p39 = scmp.eq.s32.totalorder %s17, 1
      %p40 = por %p38, %p39
      %p42 = scmp.ne.s32.totalorder %s25, %s41
      %p43 = scmp.eq.s32.totalorder %s17, 0
      %p44 = por %p42, %p43
      %s46 = sadd.s32 %s45, 1
      %p49 = scmp.eq.s32.totalorder %s11, 1
      %p50 = scmp.ne.s32.totalorder %s45, %s47
      %p51 = scmp.eq.s32.totalorder %s11, 0
      %p52 = por %p50, %p51
      %p53 = scmp.ne.s32.totalorder %s45, %s47
      %p54 = scmp.eq.s32.totalorder %s16, 1
      %p55 = por %p53, %p54
      %p56 = scmp.ne.s32.totalorder %s47, %s48
      %p57 = scmp.eq.s32.totalorder %s16, 0
      %p58 = por %p56, %p57
      %p59 = scmp.ne.s32.totalorder %s47, %s48
      %p60 = scmp.eq.s32.totalorder %s17, 1
      %p61 = por %p59, %p60
      %p63 = scmp.ne.s32.totalorder %s48, %s62
      %p64 = scmp.eq.s32.totalorder %s17, 0
      %p65 = por %p63, %p64
      %s66 = ssub.s32 %s11, %s18
      %p67 = scmp.eq.s32.totalorder %s66, 0
      %s69 = sadd.s32 %s68, 1
      %s70 = scalar_select %p67, %s68, %s69
      %p73 = pneg %p67
      %p74 = scmp.eq.s32.totalorder %s11, 1
      %p75 = por %p73, %p74
      %p76 = scmp.ne.s32.totalorder %s68, %s71
      %p77 = scmp.eq.s32.totalorder %s11, 0
      %p78 = por %p76, %p77
      %p79 = scmp.ne.s32.totalorder %s68, %s71
      %p80 = scmp.eq.s32.totalorder %s16, 1
      %p81 = por %p79, %p80
      %p82 = scmp.ne.s32.totalorder %s71, %s72
      %p83 = scmp.eq.s32.totalorder %s16, 0
      %p84 = por %p82, %p83
      %p85 = scmp.ne.s32.totalorder %s71, %s72
      %p86 = scmp.eq.s32.totalorder %s17, 1
      %p87 = por %p85, %p86
      %p89 = scmp.ne.s32.totalorder %s72, %s88
      %p90 = scmp.eq.s32.totalorder %s17, 0
      %p91 = por %p89, %p90
      %p92 = scmp.le.s32.totalorder 1, %s11
      %p93 = scmp.lt.s32.totalorder %s11, 3
      %p94 = pnand %p92, %p93
      %p95 = pneg %p94
      // Predicated region
      $region9: #{tpu_custom_call.1} parent=5 // pred_check
        _
      $region10: #{tpu_custom_call.1} parent=5 // pred_check_branch
        %97 = sbr.rel (%p94) target = $region12
      $region11: #{tpu_custom_call.1} parent=5 // pred_region
        %s98 = ssub.s32 %s11, 1
        // Predicated region
        $region13: #{tpu_custom_call.1} parent=11 // pred_check
          %p99 = pneg %p58
        $region14: #{tpu_custom_call.1} parent=11 // pred_check_branch
          %101 = sbr.rel (%p99) target = $region16
        $region15: #{tpu_custom_call.1} parent=11 // pred_region
          _
        $region16: #{tpu_custom_call.1} parent=11 // pred_fallthru
          _
      $region12: #{tpu_custom_call.1} parent=5 // pred_fallthru
        _
      %p102 = scmp.lt.s32.totalorder %s11, 2
      // Predicated region
      $region17: #{tpu_custom_call.1} parent=5 // pred_check
        %p103 = pneg %p102
      $region18: #{tpu_custom_call.1} parent=5 // pred_check_branch
        %105 = sbr.rel (%p103) target = $region20
      $region19: #{tpu_custom_call.1} parent=5 // pred_region
        // Predicated region
        $region21: #{tpu_custom_call.1} parent=19 // pred_check
          %p106 = pneg %p31
        $region22: #{tpu_custom_call.1} parent=19 // pred_check_branch
          %108 = sbr.rel (%p106) target = $region24
        $region23: #{tpu_custom_call.1} parent=19 // pred_region
          %s109 = smul.u32 64, %s11
          %p110 = scmp.lt.s32.totalorder %s109, 127
          %s111 = scalar_select %p110, %s109, 127
          %s112 = smul.addr %s111, 8
          %s113 = scalar_lea.vmem %s0, %s112
          %s114 = smul.u32 64, %s11
        $region24: #{tpu_custom_call.1} parent=19 // pred_fallthru
          _
      $region20: #{tpu_custom_call.1} parent=5 // pred_fallthru
        _
      %p115 = scmp.le.s32.totalorder 1, %s11
      %p116 = scmp.lt.s32.totalorder %s11, 3
      %p117 = pnand %p115, %p116
      %p118 = pneg %p117
      // Predicated region
      $region25: #{tpu_custom_call.1} parent=5 // pred_check
        _
      $region26: #{tpu_custom_call.1} parent=5 // pred_check_branch
        %120 = sbr.rel (%p117) target = $region28
      $region27: #{tpu_custom_call.1} parent=5 // pred_region
        %s121 = ssub.s32 %s11, 1
        %s122 = smul.u32 64, %s16
        %p123 = scmp.lt.s32.totalorder %s122, 127
        %s124 = scalar_select %p123, %s122, 127
        %s125 = smul.addr %s124, 8
        %s126 = scalar_lea.vmem %s0, %s125
        %p127 = pneg %p37
        %p128 = pneg %p34
        %p129 = pneg %p58
        %p130 = pneg %p55
        %p131 = pneg %p84
        %p132 = pneg %p81
        %s133 = sand.u32 %s71, 1
        %s134 = scalar_lea.sflag [#allocation3], %s133
        %s135 = sand.u32 %s71, 1
        %s136 = smul.addr %s135, 512
        %s137 = scalar_lea.vmem [#allocation2], %s136
        %s138 = smul.u32 64, %s16
        %p139 = scmp.lt.s32.totalorder %s138, 127
        %s140 = scalar_select %p139, %s138, 127
        %s141 = smul.addr %s140, 8
        %s142 = scalar_lea.vmem %s0, %s141
        %s143 = smul.u32 64, %s16
        %s144 = smul.u32 64, %s16
        %v145 = vld [vmem:[%s142] sm:$0xff]
        %v146 = vld [vmem:[%s142 + $0x8] sm:$0xff]
        %v147 = vld [vmem:[%s142 + $0x10] sm:$0xff]
        %v148 = vld [vmem:[%s142 + $0x18] sm:$0xff]
        %v149 = vld [vmem:[%s142 + $0x20] sm:$0xff]
        %v150 = vld [vmem:[%s142 + $0x28] sm:$0xff]
        %v151 = vld [vmem:[%s142 + $0x30] sm:$0xff]
        %v152 = vld [vmem:[%s142 + $0x38] sm:$0xff]
        %v153 = vld [vmem:[%s142 + $0x40] sm:$0xff]
        %v154 = vld [vmem:[%s142 + $0x48] sm:$0xff]
        %v155 = vld [vmem:[%s142 + $0x50] sm:$0xff]
        %v156 = vld [vmem:[%s142 + $0x58] sm:$0xff]
        %v157 = vld [vmem:[%s142 + $0x60] sm:$0xff]
        %v158 = vld [vmem:[%s142 + $0x68] sm:$0xff]
        %v159 = vld [vmem:[%s142 + $0x70] sm:$0xff]
        %v160 = vld [vmem:[%s142 + $0x78] sm:$0xff]
        %v161 = vld [vmem:[%s142 + $0x80] sm:$0xff]
        %v162 = vld [vmem:[%s142 + $0x88] sm:$0xff]
        %v163 = vld [vmem:[%s142 + $0x90] sm:$0xff]
        %v164 = vld [vmem:[%s142 + $0x98] sm:$0xff]
        %v165 = vld [vmem:[%s142 + $0xa0] sm:$0xff]
        %v166 = vld [vmem:[%s142 + $0xa8] sm:$0xff]
        %v167 = vld [vmem:[%s142 + $0xb0] sm:$0xff]
        %v168 = vld [vmem:[%s142 + $0xb8] sm:$0xff]
        %v169 = vld [vmem:[%s142 + $0xc0] sm:$0xff]
        %v170 = vld [vmem:[%s142 + $0xc8] sm:$0xff]
        %v171 = vld [vmem:[%s142 + $0xd0] sm:$0xff]
        %v172 = vld [vmem:[%s142 + $0xd8] sm:$0xff]
        %v173 = vld [vmem:[%s142 + $0xe0] sm:$0xff]
        %v174 = vld [vmem:[%s142 + $0xe8] sm:$0xff]
        %v175 = vld [vmem:[%s142 + $0xf0] sm:$0xff]
        %v176 = vld [vmem:[%s142 + $0xf8] sm:$0xff]
        %v177 = vld [vmem:[%s142 + $0x100] sm:$0xff]
        %v178 = vld [vmem:[%s142 + $0x108] sm:$0xff]
        %v179 = vld [vmem:[%s142 + $0x110] sm:$0xff]
        %v180 = vld [vmem:[%s142 + $0x118] sm:$0xff]
        %v181 = vld [vmem:[%s142 + $0x120] sm:$0xff]
        %v182 = vld [vmem:[%s142 + $0x128] sm:$0xff]
        %v183 = vld [vmem:[%s142 + $0x130] sm:$0xff]
        %v184 = vld [vmem:[%s142 + $0x138] sm:$0xff]
        %v185 = vld [vmem:[%s142 + $0x140] sm:$0xff]
        %v186 = vld [vmem:[%s142 + $0x148] sm:$0xff]
        %v187 = vld [vmem:[%s142 + $0x150] sm:$0xff]
        %v188 = vld [vmem:[%s142 + $0x158] sm:$0xff]
        %v189 = vld [vmem:[%s142 + $0x160] sm:$0xff]
        %v190 = vld [vmem:[%s142 + $0x168] sm:$0xff]
        %v191 = vld [vmem:[%s142 + $0x170] sm:$0xff]
        %v192 = vld [vmem:[%s142 + $0x178] sm:$0xff]
        %v193 = vld [vmem:[%s142 + $0x180] sm:$0xff]
        %v194 = vld [vmem:[%s142 + $0x188] sm:$0xff]
        %v195 = vld [vmem:[%s142 + $0x190] sm:$0xff]
        %v196 = vld [vmem:[%s142 + $0x198] sm:$0xff]
        %v197 = vld [vmem:[%s142 + $0x1a0] sm:$0xff]
        %v198 = vld [vmem:[%s142 + $0x1a8] sm:$0xff]
        %v199 = vld [vmem:[%s142 + $0x1b0] sm:$0xff]
        %v200 = vld [vmem:[%s142 + $0x1b8] sm:$0xff]
        %v201 = vld [vmem:[%s142 + $0x1c0] sm:$0xff]
        %v202 = vld [vmem:[%s142 + $0x1c8] sm:$0xff]
        %v203 = vld [vmem:[%s142 + $0x1d0] sm:$0xff]
        %v204 = vld [vmem:[%s142 + $0x1d8] sm:$0xff]
        %v205 = vld [vmem:[%s142 + $0x1e0] sm:$0xff]
        %v206 = vld [vmem:[%s142 + $0x1e8] sm:$0xff]
        %v207 = vld [vmem:[%s142 + $0x1f0] sm:$0xff]
        %v208 = vld [vmem:[%s142 + $0x1f8] sm:$0xff]
        %v209 = vld [vmem:[%s1] sm:$0xff]
        %v210 = vld [vmem:[%s1 + $0x8] sm:$0xff]
        %v211 = vld [vmem:[%s1 + $0x10] sm:$0xff]
        %v212 = vld [vmem:[%s1 + $0x18] sm:$0xff]
        %vm213 = vcmask 261120
        %v215 = vsel %vm213, %v145, 0
        %v218 = vsel %vm213, %v146, 0
        %v221 = vsel %vm213, %v147, 0
        %v224 = vsel %vm213, %v148, 0
        %v227 = vsel %vm213, %v149, 0
        %v230 = vsel %vm213, %v150, 0
        %v233 = vsel %vm213, %v151, 0
        %v236 = vsel %vm213, %v152, 0
        %v239 = vsel %vm213, %v153, 0
        %v242 = vsel %vm213, %v154, 0
        %v245 = vsel %vm213, %v155, 0
        %v248 = vsel %vm213, %v156, 0
        %v251 = vsel %vm213, %v157, 0
        %v254 = vsel %vm213, %v158, 0
        %v257 = vsel %vm213, %v159, 0
        %v260 = vsel %vm213, %v160, 0
        %v263 = vsel %vm213, %v161, 0
        %v266 = vsel %vm213, %v162, 0
        %v269 = vsel %vm213, %v163, 0
        %v272 = vsel %vm213, %v164, 0
        %v275 = vsel %vm213, %v165, 0
        %v278 = vsel %vm213, %v166, 0
        %v281 = vsel %vm213, %v167, 0
        %v284 = vsel %vm213, %v168, 0
        %v287 = vsel %vm213, %v169, 0
        %v290 = vsel %vm213, %v170, 0
        %v293 = vsel %vm213, %v171, 0
        %v296 = vsel %vm213, %v172, 0
        %v299 = vsel %vm213, %v173, 0
        %v302 = vsel %vm213, %v174, 0
        %v305 = vsel %vm213, %v175, 0
        %v308 = vsel %vm213, %v176, 0
        %v311 = vsel %vm213, %v177, 0
        %v314 = vsel %vm213, %v178, 0
        %v317 = vsel %vm213, %v179, 0
        %v320 = vsel %vm213, %v180, 0
        %v323 = vsel %vm213, %v181, 0
        %v326 = vsel %vm213, %v182, 0
        %v329 = vsel %vm213, %v183, 0
        %v332 = vsel %vm213, %v184, 0
        %v335 = vsel %vm213, %v185, 0
        %v338 = vsel %vm213, %v186, 0
        %v341 = vsel %vm213, %v187, 0
        %v344 = vsel %vm213, %v188, 0
        %v347 = vsel %vm213, %v189, 0
        %v350 = vsel %vm213, %v190, 0
        %v353 = vsel %vm213, %v191, 0
        %v356 = vsel %vm213, %v192, 0
        %v359 = vsel %vm213, %v193, 0
        %v362 = vsel %vm213, %v194, 0
        %v365 = vsel %vm213, %v195, 0
        %v368 = vsel %vm213, %v196, 0
        %v371 = vsel %vm213, %v197, 0
        %v374 = vsel %vm213, %v198, 0
        %v377 = vsel %vm213, %v199, 0
        %v380 = vsel %vm213, %v200, 0
        %v383 = vsel %vm213, %v201, 0
        %v386 = vsel %vm213, %v202, 0
        %v389 = vsel %vm213, %v203, 0
        %v392 = vsel %vm213, %v204, 0
        %v395 = vsel %vm213, %v205, 0
        %v398 = vsel %vm213, %v206, 0
        %v401 = vsel %vm213, %v207, 0
        %v404 = vsel %vm213, %v208, 0
        %406 = vmatprep.subr.mxu0 0.0
        %407 = vmatpush1.msra.mxu0 %v209
        %408 = vmatprep.subr.mxu0 0.0
        %409 = vmatpush1.msra.mxu0 %v210
        %410 = vmatprep.subr.mxu0 0.0
        %411 = vmatpush1.msra.mxu0 %v211
        %412 = vmatprep.subr.mxu0 0.0
        %413 = vmatpush1.msra.mxu0 %v212
        %414 = vmatprep.subr.mxu0 0.0
        %415 = vmatpush1.msra.mxu0 0.0
        %416 = vmatprep.subr.mxu0 0.0
        %417 = vmatpush1.msra.mxu0 0.0
        %418 = vmatprep.subr.mxu0 0.0
        %419 = vmatpush1.msra.mxu0 0.0
        %420 = vmatprep.subr.mxu0 0.0
        %421 = vmatpush1.msra.mxu0 0.0
        %422 = vmatprep.subr.mxu0 0.0
        %423 = vmatpush1.msra.mxu0 0.0
        %424 = vmatprep.subr.mxu0 0.0
        %425 = vmatpush1.msra.mxu0 0.0
        %426 = vmatprep.subr.mxu0 0.0
        %427 = vmatpush1.msra.mxu0 0.0
        %428 = vmatprep.subr.mxu0 0.0
        %429 = vmatpush1.msra.mxu0 0.0
        %430 = vmatprep.subr.mxu0 0.0
        %431 = vmatpush1.msra.mxu0 0.0
        %432 = vmatprep.subr.mxu0 0.0
        %433 = vmatpush1.msra.mxu0 0.0
        %434 = vmatprep.subr.mxu0 0.0
        %435 = vmatpush1.msra.mxu0 0.0
        %436 = vmatprep.subr.mxu0 0.0
        %437 = vmatpush1.msra.mxu0 0.0
        %438 = vmatprep.subr.mxu0 0.0
        %439 = vmatpush1.msra.mxu0 0.0
        %440 = vmatprep.subr.mxu0 0.0
        %441 = vmatpush1.msra.mxu0 0.0
        %442 = vmatprep.subr.mxu0 0.0
        %443 = vmatpush1.msra.mxu0 0.0
        %444 = vmatprep.subr.mxu0 0.0
        %445 = vmatpush1.msra.mxu0 0.0
        %446 = vmatprep.subr.mxu0 0.0
        %447 = vmatpush1.msra.mxu0 0.0
        %448 = vmatprep.subr.mxu0 0.0
        %449 = vmatpush1.msra.mxu0 0.0
        %450 = vmatprep.subr.mxu0 0.0
        %451 = vmatpush1.msra.mxu0 0.0
        %452 = vmatprep.subr.mxu0 0.0
        %453 = vmatpush1.msra.mxu0 0.0
        %454 = vmatprep.subr.mxu0 0.0
        %455 = vmatpush1.msra.mxu0 0.0
        %456 = vmatprep.subr.mxu0 0.0
        %457 = vmatpush1.msra.mxu0 0.0
        %458 = vmatprep.subr.mxu0 0.0
        %459 = vmatpush1.msra.mxu0 0.0
        %460 = vmatprep.subr.mxu0 0.0
        %461 = vmatpush1.msra.mxu0 0.0
        %462 = vmatprep.subr.mxu0 0.0
        %463 = vmatpush1.msra.mxu0 0.0
        %464 = vmatprep.subr.mxu0 0.0
        %465 = vmatpush1.msra.mxu0 0.0
        %466 = vmatprep.subr.mxu0 0.0
        %467 = vmatpush1.msra.mxu0 0.0
        %468 = vmatprep.subr.mxu0 0.0
        %469 = vmatpush1.msra.mxu0 0.0
        %470 = vmatprep.mubr.f32.mxu0 0.0
        %471 = vmatmul.mubr.f32.gmra.mrb[0].mxu0 %v215
        %v472 = vpop.f32.mrb[0].mxu0
        %v473 = vadd.f32 0.0, %v472
        %v474 = vpop.f32.mrb[0].mxu0
        %475 = vmatprep.mubr.f32.mxu0 0.0
        %476 = vmatmul.mubr.f32.gmra.mrb[0].mxu0 %v218
        %v477 = vpop.f32.mrb[0].mxu0
        %v478 = vadd.f32 0.0, %v477
        %v479 = vpop.f32.mrb[0].mxu0
        %480 = vmatprep.mubr.f32.mxu0 0.0
        %481 = vmatmul.mubr.f32.gmra.mrb[0].mxu0 %v221
        %v482 = vpop.f32.mrb[0].mxu0
        %v483 = vadd.f32 0.0, %v482
        %v484 = vpop.f32.mrb[0].mxu0
        %485 = vmatprep.mubr.f32.mxu0 0.0
        %486 = vmatmul.mubr.f32.gmra.mrb[0].mxu0 %v224
        %v487 = vpop.f32.mrb[0].mxu0
        %v488 = vadd.f32 0.0, %v487
        %v489 = vpop.f32.mrb[0].mxu0
        %490 = vmatprep.mubr.f32.mxu0 0.0
        %491 = vmatmul.mubr.f32.gmra.mrb[0].mxu0 %v227
        %v492 = vpop.f32.mrb[0].mxu0
        %v493 = vadd.f32 0.0, %v492
        %v494 = vpop.f32.mrb[0].mxu0
        %495 = vmatprep.mubr.f32.mxu0 0.0
        %496 = vmatmul.mubr.f32.gmra.mrb[0].mxu0 %v230
        %v497 = vpop.f32.mrb[0].mxu0
        %v498 = vadd.f32 0.0, %v497
        %v499 = vpop.f32.mrb[0].mxu0
        %500 = vmatprep.mubr.f32.mxu0 0.0
        %501 = vmatmul.mubr.f32.gmra.mrb[0].mxu0 %v233
        %v502 = vpop.f32.mrb[0].mxu0
        %v503 = vadd.f32 0.0, %v502
        %v504 = vpop.f32.mrb[0].mxu0
        %505 = vmatprep.mubr.f32.mxu0 0.0
        %506 = vmatmul.mubr.f32.gmra.mrb[0].mxu0 %v236
        %v507 = vpop.f32.mrb[0].mxu0
        %v508 = vadd.f32 0.0, %v507
        %v509 = vpop.f32.mrb[0].mxu0
        %510 = vmatprep.mubr.f32.mxu0 0.0
        %511 = vmatmul.mubr.f32.gmra.mrb[0].mxu0 %v239
        %v512 = vpop.f32.mrb[0].mxu0
        %v513 = vadd.f32 0.0, %v512
        %v514 = vpop.f32.mrb[0].mxu0
        %515 = vmatprep.mubr.f32.mxu0 0.0
        %516 = vmatmul.mubr.f32.gmra.mrb[0].mxu0 %v242
        %v517 = vpop.f32.mrb[0].mxu0
        %v518 = vadd.f32 0.0, %v517
        %v519 = vpop.f32.mrb[0].mxu0
        %520 = vmatprep.mubr.f32.mxu0 0.0
        %521 = vmatmul.mubr.f32.gmra.mrb[0].mxu0 %v245
        %v522 = vpop.f32.mrb[0].mxu0
        %v523 = vadd.f32 0.0, %v522
        %v524 = vpop.f32.mrb[0].mxu0
        %525 = vmatprep.mubr.f32.mxu0 0.0
        %526 = vmatmul.mubr.f32.gmra.mrb[0].mxu0 %v248
        %v527 = vpop.f32.mrb[0].mxu0
        %v528 = vadd.f32 0.0, %v527
        %v529 = vpop.f32.mrb[0].mxu0
        %530 = vmatprep.mubr.f32.mxu0 0.0
        %531 = vmatmul.mubr.f32.gmra.mrb[0].mxu0 %v251
        %v532 = vpop.f32.mrb[0].mxu0
        %v533 = vadd.f32 0.0, %v532
        %v534 = vpop.f32.mrb[0].mxu0
        %535 = vmatprep.mubr.f32.mxu0 0.0
        %536 = vmatmul.mubr.f32.gmra.mrb[0].mxu0 %v254
        %v537 = vpop.f32.mrb[0].mxu0
        %v538 = vadd.f32 0.0, %v537
        %v539 = vpop.f32.mrb[0].mxu0
        %540 = vmatprep.mubr.f32.mxu0 0.0
        %541 = vmatmul.mubr.f32.gmra.mrb[0].mxu0 %v257
        %v542 = vpop.f32.mrb[0].mxu0
        %v543 = vadd.f32 0.0, %v542
        %v544 = vpop.f32.mrb[0].mxu0
        %545 = vmatprep.mubr.f32.mxu0 0.0
        %546 = vmatmul.mubr.f32.gmra.mrb[0].mxu0 %v260
        %v547 = vpop.f32.mrb[0].mxu0
        %v548 = vadd.f32 0.0, %v547
        %v549 = vpop.f32.mrb[0].mxu0
        %550 = vmatprep.mubr.f32.mxu0 0.0
        %551 = vmatmul.mubr.f32.gmra.mrb[0].mxu0 %v263
        %v552 = vpop.f32.mrb[0].mxu0
        %v553 = vadd.f32 0.0, %v552
        %v554 = vpop.f32.mrb[0].mxu0
        %555 = vmatprep.mubr.f32.mxu0 0.0
        %556 = vmatmul.mubr.f32.gmra.mrb[0].mxu0 %v266
        %v557 = vpop.f32.mrb[0].mxu0
        %v558 = vadd.f32 0.0, %v557
        %v559 = vpop.f32.mrb[0].mxu0
        %560 = vmatprep.mubr.f32.mxu0 0.0
        %561 = vmatmul.mubr.f32.gmra.mrb[0].mxu0 %v269
        %v562 = vpop.f32.mrb[0].mxu0
        %v563 = vadd.f32 0.0, %v562
        %v564 = vpop.f32.mrb[0].mxu0
        %565 = vmatprep.mubr.f32.mxu0 0.0
        %566 = vmatmul.mubr.f32.gmra.mrb[0].mxu0 %v272
        %v567 = vpop.f32.mrb[0].mxu0
        %v568 = vadd.f32 0.0, %v567
        %v569 = vpop.f32.mrb[0].mxu0
        %570 = vmatprep.mubr.f32.mxu0 0.0
        %571 = vmatmul.mubr.f32.gmra.mrb[0].mxu0 %v275
        %v572 = vpop.f32.mrb[0].mxu0
        %v573 = vadd.f32 0.0, %v572
        %v574 = vpop.f32.mrb[0].mxu0
        %575 = vmatprep.mubr.f32.mxu0 0.0
        %576 = vmatmul.mubr.f32.gmra.mrb[0].mxu0 %v278
        %v577 = vpop.f32.mrb[0].mxu0
        %v578 = vadd.f32 0.0, %v577
        %v579 = vpop.f32.mrb[0].mxu0
        %580 = vmatprep.mubr.f32.mxu0 0.0
        %581 = vmatmul.mubr.f32.gmra.mrb[0].mxu0 %v281
        %v582 = vpop.f32.mrb[0].mxu0
        %v583 = vadd.f32 0.0, %v582
        %v584 = vpop.f32.mrb[0].mxu0
        %585 = vmatprep.mubr.f32.mxu0 0.0
        %586 = vmatmul.mubr.f32.gmra.mrb[0].mxu0 %v284
        %v587 = vpop.f32.mrb[0].mxu0
        %v588 = vadd.f32 0.0, %v587
        %v589 = vpop.f32.mrb[0].mxu0
        %590 = vmatprep.mubr.f32.mxu0 0.0
        %591 = vmatmul.mubr.f32.gmra.mrb[0].mxu0 %v287
        %v592 = vpop.f32.mrb[0].mxu0
        %v593 = vadd.f32 0.0, %v592
        %v594 = vpop.f32.mrb[0].mxu0
        %595 = vmatprep.mubr.f32.mxu0 0.0
        %596 = vmatmul.mubr.f32.gmra.mrb[0].mxu0 %v290
        %v597 = vpop.f32.mrb[0].mxu0
        %v598 = vadd.f32 0.0, %v597
        %v599 = vpop.f32.mrb[0].mxu0
        %600 = vmatprep.mubr.f32.mxu0 0.0
        %601 = vmatmul.mubr.f32.gmra.mrb[0].mxu0 %v293
        %v602 = vpop.f32.mrb[0].mxu0
        %v603 = vadd.f32 0.0, %v602
        %v604 = vpop.f32.mrb[0].mxu0
        %605 = vmatprep.mubr.f32.mxu0 0.0
        %606 = vmatmul.mubr.f32.gmra.mrb[0].mxu0 %v296
        %v607 = vpop.f32.mrb[0].mxu0
        %v608 = vadd.f32 0.0, %v607
        %v609 = vpop.f32.mrb[0].mxu0
        %610 = vmatprep.mubr.f32.mxu0 0.0
        %611 = vmatmul.mubr.f32.gmra.mrb[0].mxu0 %v299
        %v612 = vpop.f32.mrb[0].mxu0
        %v613 = vadd.f32 0.0, %v612
        %v614 = vpop.f32.mrb[0].mxu0
        %615 = vmatprep.mubr.f32.mxu0 0.0
        %616 = vmatmul.mubr.f32.gmra.mrb[0].mxu0 %v302
        %v617 = vpop.f32.mrb[0].mxu0
        %v618 = vadd.f32 0.0, %v617
        %v619 = vpop.f32.mrb[0].mxu0
        %620 = vmatprep.mubr.f32.mxu0 0.0
        %621 = vmatmul.mubr.f32.gmra.mrb[0].mxu0 %v305
        %v622 = vpop.f32.mrb[0].mxu0
        %v623 = vadd.f32 0.0, %v622
        %v624 = vpop.f32.mrb[0].mxu0
        %625 = vmatprep.mubr.f32.mxu0 0.0
        %626 = vmatmul.mubr.f32.gmra.mrb[0].mxu0 %v308
        %v627 = vpop.f32.mrb[0].mxu0
        %v628 = vadd.f32 0.0, %v627
        %v629 = vpop.f32.mrb[0].mxu0
        %630 = vmatprep.mubr.f32.mxu0 0.0
        %631 = vmatmul.mubr.f32.gmra.mrb[0].mxu0 %v311
        %v632 = vpop.f32.mrb[0].mxu0
        %v633 = vadd.f32 0.0, %v632
        %v634 = vpop.f32.mrb[0].mxu0
        %635 = vmatprep.mubr.f32.mxu0 0.0
        %636 = vmatmul.mubr.f32.gmra.mrb[0].mxu0 %v314
        %v637 = vpop.f32.mrb[0].mxu0
        %v638 = vadd.f32 0.0, %v637
        %v639 = vpop.f32.mrb[0].mxu0
        %640 = vmatprep.mubr.f32.mxu0 0.0
        %641 = vmatmul.mubr.f32.gmra.mrb[0].mxu0 %v317
        %v642 = vpop.f32.mrb[0].mxu0
        %v643 = vadd.f32 0.0, %v642
        %v644 = vpop.f32.mrb[0].mxu0
        %645 = vmatprep.mubr.f32.mxu0 0.0
        %646 = vmatmul.mubr.f32.gmra.mrb[0].mxu0 %v320
        %v647 = vpop.f32.mrb[0].mxu0
        %v648 = vadd.f32 0.0, %v647
        %v649 = vpop.f32.mrb[0].mxu0
        %650 = vmatprep.mubr.f32.mxu0 0.0
        %651 = vmatmul.mubr.f32.gmra.mrb[0].mxu0 %v323
        %v652 = vpop.f32.mrb[0].mxu0
        %v653 = vadd.f32 0.0, %v652
        %v654 = vpop.f32.mrb[0].mxu0
        %655 = vmatprep.mubr.f32.mxu0 0.0
        %656 = vmatmul.mubr.f32.gmra.mrb[0].mxu0 %v326
        %v657 = vpop.f32.mrb[0].mxu0
        %v658 = vadd.f32 0.0, %v657
        %v659 = vpop.f32.mrb[0].mxu0
        %660 = vmatprep.mubr.f32.mxu0 0.0
        %661 = vmatmul.mubr.f32.gmra.mrb[0].mxu0 %v329
        %v662 = vpop.f32.mrb[0].mxu0
        %v663 = vadd.f32 0.0, %v662
        %v664 = vpop.f32.mrb[0].mxu0
        %665 = vmatprep.mubr.f32.mxu0 0.0
        %666 = vmatmul.mubr.f32.gmra.mrb[0].mxu0 %v332
        %v667 = vpop.f32.mrb[0].mxu0
        %v668 = vadd.f32 0.0, %v667
        %v669 = vpop.f32.mrb[0].mxu0
        %670 = vmatprep.mubr.f32.mxu0 0.0
        %671 = vmatmul.mubr.f32.gmra.mrb[0].mxu0 %v335
        %v672 = vpop.f32.mrb[0].mxu0
        %v673 = vadd.f32 0.0, %v672
        %v674 = vpop.f32.mrb[0].mxu0
        %675 = vmatprep.mubr.f32.mxu0 0.0
        %676 = vmatmul.mubr.f32.gmra.mrb[0].mxu0 %v338
        %v677 = vpop.f32.mrb[0].mxu0
        %v678 = vadd.f32 0.0, %v677
        %v679 = vpop.f32.mrb[0].mxu0
        %680 = vmatprep.mubr.f32.mxu0 0.0
        %681 = vmatmul.mubr.f32.gmra.mrb[0].mxu0 %v341
        %v682 = vpop.f32.mrb[0].mxu0
        %v683 = vadd.f32 0.0, %v682
        %v684 = vpop.f32.mrb[0].mxu0
        %685 = vmatprep.mubr.f32.mxu0 0.0
        %686 = vmatmul.mubr.f32.gmra.mrb[0].mxu0 %v344
        %v687 = vpop.f32.mrb[0].mxu0
        %v688 = vadd.f32 0.0, %v687
        %v689 = vpop.f32.mrb[0].mxu0
        %690 = vmatprep.mubr.f32.mxu0 0.0
        %691 = vmatmul.mubr.f32.gmra.mrb[0].mxu0 %v347
        %v692 = vpop.f32.mrb[0].mxu0
        %v693 = vadd.f32 0.0, %v692
        %v694 = vpop.f32.mrb[0].mxu0
        %695 = vmatprep.mubr.f32.mxu0 0.0
        %696 = vmatmul.mubr.f32.gmra.mrb[0].mxu0 %v350
        %v697 = vpop.f32.mrb[0].mxu0
        %v698 = vadd.f32 0.0, %v697
        %v699 = vpop.f32.mrb[0].mxu0
        %700 = vmatprep.mubr.f32.mxu0 0.0
        %701 = vmatmul.mubr.f32.gmra.mrb[0].mxu0 %v353
        %v702 = vpop.f32.mrb[0].mxu0
        %v703 = vadd.f32 0.0, %v702
        %v704 = vpop.f32.mrb[0].mxu0
        %705 = vmatprep.mubr.f32.mxu0 0.0
        %706 = vmatmul.mubr.f32.gmra.mrb[0].mxu0 %v356
        %v707 = vpop.f32.mrb[0].mxu0
        %v708 = vadd.f32 0.0, %v707
        %v709 = vpop.f32.mrb[0].mxu0
        %710 = vmatprep.mubr.f32.mxu0 0.0
        %711 = vmatmul.mubr.f32.gmra.mrb[0].mxu0 %v359
        %v712 = vpop.f32.mrb[0].mxu0
        %v713 = vadd.f32 0.0, %v712
        %v714 = vpop.f32.mrb[0].mxu0
        %715 = vmatprep.mubr.f32.mxu0 0.0
        %716 = vmatmul.mubr.f32.gmra.mrb[0].mxu0 %v362
        %v717 = vpop.f32.mrb[0].mxu0
        %v718 = vadd.f32 0.0, %v717
        %v719 = vpop.f32.mrb[0].mxu0
        %720 = vmatprep.mubr.f32.mxu0 0.0
        %721 = vmatmul.mubr.f32.gmra.mrb[0].mxu0 %v365
        %v722 = vpop.f32.mrb[0].mxu0
        %v723 = vadd.f32 0.0, %v722
        %v724 = vpop.f32.mrb[0].mxu0
        %725 = vmatprep.mubr.f32.mxu0 0.0
        %726 = vmatmul.mubr.f32.gmra.mrb[0].mxu0 %v368
        %v727 = vpop.f32.mrb[0].mxu0
        %v728 = vadd.f32 0.0, %v727
        %v729 = vpop.f32.mrb[0].mxu0
        %730 = vmatprep.mubr.f32.mxu0 0.0
        %731 = vmatmul.mubr.f32.gmra.mrb[0].mxu0 %v371
        %v732 = vpop.f32.mrb[0].mxu0
        %v733 = vadd.f32 0.0, %v732
        %v734 = vpop.f32.mrb[0].mxu0
        %735 = vmatprep.mubr.f32.mxu0 0.0
        %736 = vmatmul.mubr.f32.gmra.mrb[0].mxu0 %v374
        %v737 = vpop.f32.mrb[0].mxu0
        %v738 = vadd.f32 0.0, %v737
        %v739 = vpop.f32.mrb[0].mxu0
        %740 = vmatprep.mubr.f32.mxu0 0.0
        %741 = vmatmul.mubr.f32.gmra.mrb[0].mxu0 %v377
        %v742 = vpop.f32.mrb[0].mxu0
        %v743 = vadd.f32 0.0, %v742
        %v744 = vpop.f32.mrb[0].mxu0
        %745 = vmatprep.mubr.f32.mxu0 0.0
        %746 = vmatmul.mubr.f32.gmra.mrb[0].mxu0 %v380
        %v747 = vpop.f32.mrb[0].mxu0
        %v748 = vadd.f32 0.0, %v747
        %v749 = vpop.f32.mrb[0].mxu0
        %750 = vmatprep.mubr.f32.mxu0 0.0
        %751 = vmatmul.mubr.f32.gmra.mrb[0].mxu0 %v383
        %v752 = vpop.f32.mrb[0].mxu0
        %v753 = vadd.f32 0.0, %v752
        %v754 = vpop.f32.mrb[0].mxu0
        %755 = vmatprep.mubr.f32.mxu0 0.0
        %756 = vmatmul.mubr.f32.gmra.mrb[0].mxu0 %v386
        %v757 = vpop.f32.mrb[0].mxu0
        %v758 = vadd.f32 0.0, %v757
        %v759 = vpop.f32.mrb[0].mxu0
        %760 = vmatprep.mubr.f32.mxu0 0.0
        %761 = vmatmul.mubr.f32.gmra.mrb[0].mxu0 %v389
        %v762 = vpop.f32.mrb[0].mxu0
        %v763 = vadd.f32 0.0, %v762
        %v764 = vpop.f32.mrb[0].mxu0
        %765 = vmatprep.mubr.f32.mxu0 0.0
        %766 = vmatmul.mubr.f32.gmra.mrb[0].mxu0 %v392
        %v767 = vpop.f32.mrb[0].mxu0
        %v768 = vadd.f32 0.0, %v767
        %v769 = vpop.f32.mrb[0].mxu0
        %770 = vmatprep.mubr.f32.mxu0 0.0
        %771 = vmatmul.mubr.f32.gmra.mrb[0].mxu0 %v395
        %v772 = vpop.f32.mrb[0].mxu0
        %v773 = vadd.f32 0.0, %v772
        %v774 = vpop.f32.mrb[0].mxu0
        %775 = vmatprep.mubr.f32.mxu0 0.0
        %776 = vmatmul.mubr.f32.gmra.mrb[0].mxu0 %v398
        %v777 = vpop.f32.mrb[0].mxu0
        %v778 = vadd.f32 0.0, %v777
        %v779 = vpop.f32.mrb[0].mxu0
        %780 = vmatprep.mubr.f32.mxu0 0.0
        %781 = vmatmul.mubr.f32.gmra.mrb[0].mxu0 %v401
        %v782 = vpop.f32.mrb[0].mxu0
        %v783 = vadd.f32 0.0, %v782
        %v784 = vpop.f32.mrb[0].mxu0
        %785 = vmatprep.mubr.f32.mxu0 0.0
        %786 = vmatmul.mubr.f32.gmra.mrb[0].mxu0 %v404
        %v787 = vpop.f32.mrb[0].mxu0
        %v788 = vadd.f32 0.0, %v787
        %v789 = vpop.f32.mrb[0].mxu0
        %790 = vdwg.mxu0
        %791 = vst [vmem:[%s137] sm:$0xff] %v473
        %792 = vst [vmem:[%s137 + $0x8] sm:$0xff] %v478
        %793 = vst [vmem:[%s137 + $0x10] sm:$0xff] %v483
        %794 = vst [vmem:[%s137 + $0x18] sm:$0xff] %v488
        %795 = vst [vmem:[%s137 + $0x20] sm:$0xff] %v493
        %796 = vst [vmem:[%s137 + $0x28] sm:$0xff] %v498
        %797 = vst [vmem:[%s137 + $0x30] sm:$0xff] %v503
        %798 = vst [vmem:[%s137 + $0x38] sm:$0xff] %v508
        %799 = vst [vmem:[%s137 + $0x40] sm:$0xff] %v513
        %800 = vst [vmem:[%s137 + $0x48] sm:$0xff] %v518
        %801 = vst [vmem:[%s137 + $0x50] sm:$0xff] %v523
        %802 = vst [vmem:[%s137 + $0x58] sm:$0xff] %v528
        %803 = vst [vmem:[%s137 + $0x60] sm:$0xff] %v533
        %804 = vst [vmem:[%s137 + $0x68] sm:$0xff] %v538
        %805 = vst [vmem:[%s137 + $0x70] sm:$0xff] %v543
        %806 = vst [vmem:[%s137 + $0x78] sm:$0xff] %v548
        %807 = vst [vmem:[%s137 + $0x80] sm:$0xff] %v553
        %808 = vst [vmem:[%s137 + $0x88] sm:$0xff] %v558
        %809 = vst [vmem:[%s137 + $0x90] sm:$0xff] %v563
        %810 = vst [vmem:[%s137 + $0x98] sm:$0xff] %v568
        %811 = vst [vmem:[%s137 + $0xa0] sm:$0xff] %v573
        %812 = vst [vmem:[%s137 + $0xa8] sm:$0xff] %v578
        %813 = vst [vmem:[%s137 + $0xb0] sm:$0xff] %v583
        %814 = vst [vmem:[%s137 + $0xb8] sm:$0xff] %v588
        %815 = vst [vmem:[%s137 + $0xc0] sm:$0xff] %v593
        %816 = vst [vmem:[%s137 + $0xc8] sm:$0xff] %v598
        %817 = vst [vmem:[%s137 + $0xd0] sm:$0xff] %v603
        %818 = vst [vmem:[%s137 + $0xd8] sm:$0xff] %v608
        %819 = vst [vmem:[%s137 + $0xe0] sm:$0xff] %v613
        %820 = vst [vmem:[%s137 + $0xe8] sm:$0xff] %v618
        %821 = vst [vmem:[%s137 + $0xf0] sm:$0xff] %v623
        %822 = vst [vmem:[%s137 + $0xf8] sm:$0xff] %v628
        %823 = vst [vmem:[%s137 + $0x100] sm:$0xff] %v633
        %824 = vst [vmem:[%s137 + $0x108] sm:$0xff] %v638
        %825 = vst [vmem:[%s137 + $0x110] sm:$0xff] %v643
        %826 = vst [vmem:[%s137 + $0x118] sm:$0xff] %v648
        %827 = vst [vmem:[%s137 + $0x120] sm:$0xff] %v653
        %828 = vst [vmem:[%s137 + $0x128] sm:$0xff] %v658
        %829 = vst [vmem:[%s137 + $0x130] sm:$0xff] %v663
        %830 = vst [vmem:[%s137 + $0x138] sm:$0xff] %v668
        %831 = vst [vmem:[%s137 + $0x140] sm:$0xff] %v673
        %832 = vst [vmem:[%s137 + $0x148] sm:$0xff] %v678
        %833 = vst [vmem:[%s137 + $0x150] sm:$0xff] %v683
        %834 = vst [vmem:[%s137 + $0x158] sm:$0xff] %v688
        %835 = vst [vmem:[%s137 + $0x160] sm:$0xff] %v693
        %836 = vst [vmem:[%s137 + $0x168] sm:$0xff] %v698
        %837 = vst [vmem:[%s137 + $0x170] sm:$0xff] %v703
        %838 = vst [vmem:[%s137 + $0x178] sm:$0xff] %v708
        %839 = vst [vmem:[%s137 + $0x180] sm:$0xff] %v713
        %840 = vst [vmem:[%s137 + $0x188] sm:$0xff] %v718
        %841 = vst [vmem:[%s137 + $0x190] sm:$0xff] %v723
        %842 = vst [vmem:[%s137 + $0x198] sm:$0xff] %v728
        %843 = vst [vmem:[%s137 + $0x1a0] sm:$0xff] %v733
        %844 = vst [vmem:[%s137 + $0x1a8] sm:$0xff] %v738
        %845 = vst [vmem:[%s137 + $0x1b0] sm:$0xff] %v743
        %846 = vst [vmem:[%s137 + $0x1b8] sm:$0xff] %v748
        %847 = vst [vmem:[%s137 + $0x1c0] sm:$0xff] %v753
        %848 = vst [vmem:[%s137 + $0x1c8] sm:$0xff] %v758
        %849 = vst [vmem:[%s137 + $0x1d0] sm:$0xff] %v763
        %850 = vst [vmem:[%s137 + $0x1d8] sm:$0xff] %v768
        %851 = vst [vmem:[%s137 + $0x1e0] sm:$0xff] %v773
        %852 = vst [vmem:[%s137 + $0x1e8] sm:$0xff] %v778
        %853 = vst [vmem:[%s137 + $0x1f0] sm:$0xff] %v783
        %854 = vst [vmem:[%s137 + $0x1f8] sm:$0xff] %v788
        %s855 = sand.u32 %s71, 1
        %s856 = scalar_lea.sflag [#allocation3], %s855
        %s857 = sand.u32 %s71, 1
        %s858 = smul.addr %s857, 512
        %s859 = scalar_lea.vmem [#allocation2], %s858
        // Predicated region
        $region29: #{tpu_custom_call.1} parent=27 // pred_check
          %p860 = pneg %p81
        $region30: #{tpu_custom_call.1} parent=27 // pred_check_branch
          %862 = sbr.rel (%p860) target = $region32
        $region31: #{tpu_custom_call.1} parent=27 // pred_region
          %s863 = smul.u32 64, %s16
          %s865 = ssub.s32 8192, 8192
          %866 = vsyncadd %s856, %s865
          %s867 = smul.addr %s863, 128
          %s868 = scalar_lea.hbm %s2, %s867
          %s869 = sshll.u32 %s859, 4
          %s870 = int_to_ptr.vmem [resolvable:$true] %s869
          %875 = dma.vmem_to_hbm [thread:$0]  %s870, 8192, %s868, %s856, 128, 128, 8
        $region32: #{tpu_custom_call.1} parent=27 // pred_fallthru
          _
      $region28: #{tpu_custom_call.1} parent=5 // pred_fallthru
        _
      %p876 = scmp.le.s32.totalorder 2, %s11
      // Predicated region
      $region33: #{tpu_custom_call.1} parent=5 // pred_check
        %p877 = pneg %p876
      $region34: #{tpu_custom_call.1} parent=5 // pred_check_branch
        %879 = sbr.rel (%p877) target = $region36
      $region35: #{tpu_custom_call.1} parent=5 // pred_region
        %s880 = ssub.s32 %s11, 2
        // Predicated region
        $region37: #{tpu_custom_call.1} parent=35 // pred_check
          %p881 = pneg %p87
        $region38: #{tpu_custom_call.1} parent=35 // pred_check_branch
          %883 = sbr.rel (%p881) target = $region40
        $region39: #{tpu_custom_call.1} parent=35 // pred_region
          %s884 = sand.u32 %s72, 1
          %s885 = scalar_lea.sflag [#allocation3], %s884
          %s886 = sand.u32 %s72, 1
          %s887 = smul.addr %s886, 512
          %s888 = scalar_lea.vmem [#allocation2], %s887
          %889 = dma.done %s885, 8192
        $region40: #{tpu_custom_call.1} parent=35 // pred_fallthru
          _
      $region36: #{tpu_custom_call.1} parent=5 // pred_fallthru
        _
    $region6: #{tpu_custom_call.1} parent=1 // loop_footer
      %s15 = sadd.s32 1, %s11
    $region7: #{tpu_custom_call.1} parent=1 // loop_footer_branch
      %10 = sbr.rel target = $region3
    $region8: #{tpu_custom_call.1} parent=1 // loop_exit
      _
    %890 = vsyncpa [#allocation3], 1
    %s891 = scalar_lea.sflag [#allocation3], 1
    %892 = vsyncpa %s891, 1

</llo_original>
